<compile_context>
chip_gen: v5e
topology: v5e:2x2
jax: 0.10.0
libtpu: 0.0.40
codegen_flags: <defaults>
</compile_context>

<pallas_src>
import math

import jax
import jax.numpy as jnp
from jax import lax
from jax.experimental import pallas as pl
from jax.experimental.pallas import tpu as pltpu


def _round_up(x, m):
    return ((x + m - 1) // m) * m


def agcn_forward(x, node_embeddings, weights_pool, bias_pool, *,
                 batch_tile=None, matmul_dtype=jnp.float32):
    """AGCN forward. x: [B, N, C_in] -> [B, N, C_out]."""
    B, N, dim_in = x.shape
    embed_dim, cheb_k, dim_in_w, dim_out = weights_pool.shape
    assert dim_in_w == dim_in
    assert node_embeddings.shape == (N, embed_dim)
    assert bias_pool.shape == (embed_dim, dim_out)
    assert cheb_k >= 2, "Chebyshev order must be >= 2 (matches the torch code)"

    f32 = jnp.float32
    K, Ci, Co, D = cheb_k, dim_in, dim_out, embed_dim
    kcico = K * Ci * Co

    # ---------------------------------------------------------------- tiling
    # Lane-dense batch tile: TB*Ci and TB*Co must both be multiples of 128.
    tb_base = max(128 // math.gcd(128, Ci), 128 // math.gcd(128, Co))
    if batch_tile is None:
        TB = tb_base
    else:
        TB = _round_up(max(1, int(batch_tile)), tb_base)
    n_tiles = max(1, -(-B // TB))
    Bp = n_tiles * TB

    # Pad N to a sublane multiple (f32: 8).
    Np = _round_up(N, 8)

    sup_itemsize = jnp.dtype(matmul_dtype).itemsize
    x_itemsize = x.dtype.itemsize

    # ------------------------------------------------------------------ setup
    emb = node_embeddings.astype(f32)
    if Np != N:
        emb = jnp.concatenate([emb, jnp.zeros((Np - N, D), f32)], axis=0)
    wpool_flat = weights_pool.astype(f32).reshape(D, kcico)
    bpool = bias_pool.astype(f32)

    def setup_kernel(emb_ref, wpool_ref, bpool_ref, sup_ref, w_ref, b_ref):
        E = emb_ref[...]                                            # [Np, D]

        # supports = softmax(relu(E @ E^T), axis=1); padded columns masked.
        logits = lax.dot_general(E, E, (((1,), (1,)), ((), ())),
                                 preferred_element_type=f32)        # [Np, Np]
        logits = jnp.maximum(logits, 0.0)
        if Np != N:
            col = lax.broadcasted_iota(jnp.int32, (Np, Np), 1)
            logits = jnp.where(col < N, logits, -1e30)
        logits = logits - jnp.max(logits, axis=1, keepdims=True)
        ex = jnp.exp(logits)
        S = ex / jnp.sum(ex, axis=1, keepdims=True)                 # [Np, Np]

        # Chebyshev terms T_1..T_{K-1} (identity term applied implicitly in
        # the batch kernel), stacked into ONE [(K-1)*Np, Np] slab so the batch
        # kernel does a single tall propagation matmul.
        Ts = [S]
        if K > 2:
            row = lax.broadcasted_iota(jnp.int32, (Np, Np), 0)
            colI = lax.broadcasted_iota(jnp.int32, (Np, Np), 1)
            prev2 = jnp.where(row == colI, 1.0, 0.0).astype(f32)    # T_0 = I
            for _ in range(2, K):
                Tnew = 2.0 * jnp.dot(S, Ts[-1],
                                     preferred_element_type=f32) - prev2
                prev2 = Ts[-1]
                Ts.append(Tnew)
        for j in range(K - 1):
            sup_ref[pl.ds(j * Np, Np), :] = Ts[j].astype(matmul_dtype)

        # Per-node weights with ONE fused [Np, D] @ [D, K*Ci*Co] matmul.
        w_ref[...] = jnp.dot(E, wpool_ref[...], preferred_element_type=f32)
        b_ref[...] = jnp.dot(E, bpool_ref[...], preferred_element_type=f32)

    setup_flops = (2 * Np * Np * D + max(0, K - 2) * 2 * Np * Np * Np
                   + 2 * Np * D * kcico + 2 * Np * D * Co)
    setup_bytes = ((Np * D + D * kcico + D * Co) * 4
                   + (K - 1) * Np * Np * sup_itemsize
                   + (Np * kcico + Np * Co) * 4)
    setup_need = (K + 6) * Np * Np * 4 + setup_bytes
    setup_vmem = int(min(max(2 * setup_need, 16 << 20), 40 << 20))

    supports, w_flat, bias = pl.pallas_call(
        setup_kernel,
        out_shape=(
            jax.ShapeDtypeStruct(((K - 1) * Np, Np), matmul_dtype),
            jax.ShapeDtypeStruct((Np, kcico), f32),
            jax.ShapeDtypeStruct((Np, Co), f32),
        ),
        compiler_params=pltpu.CompilerParams(vmem_limit_bytes=setup_vmem),
        cost_estimate=pl.CostEstimate(flops=int(setup_flops),
                                      transcendentals=int(Np * Np),
                                      bytes_accessed=int(setup_bytes)),
    )(emb, wpool_flat, bpool)

    # Pre-broadcast per-node weight columns / bias to [*, Np, TB] slabs (done
    # ONCE, batch-independently, by XLA) so the batch-kernel projection is
    # pure full-slab FMAs with zero in-kernel lane extracts or broadcasts.
    # w_flat[n, (k*Ci+i)*Co + o] == W[n, k, i, o].
    w_bcast = jnp.broadcast_to(w_flat.T[:, :, None], (kcico, Np, TB))
    b_bcast = jnp.broadcast_to(bias.T[:, :, None], (Co, Np, TB))

    # ------------------------------------------------------- batch re-layout
    # x -> [n_tiles, Np, Ci*TB], channel-major / batch-minor on the lane axis.
    if Bp != B or Np != N:
        xp = jnp.zeros((Bp, Np, Ci), x.dtype).at[:B, :N, :].set(x)
    else:
        xp = x
    x_tiled = (xp.reshape(n_tiles, TB, Np, Ci)
                 .transpose(0, 2, 3, 1)
                 .reshape(n_tiles, Np, Ci * TB))

    # ---------------------------------------------------------- batch kernel
    def batch_kernel(x_ref, sup_ref, wb_ref, bb_ref, out_ref):
        x2 = x_ref[0]                                   # [Np, Ci*TB]
        x2f = x2.astype(f32)

        # Graph propagation: ONE tall lane-dense MXU matmul; the k=0
        # (identity) Chebyshev term is x2 itself.
        prop = jnp.dot(sup_ref[...], x2.astype(matmul_dtype),
                       preferred_element_type=f32)      # [(K-1)*Np, Ci*TB]
        xg = [x2f] + [prop[k * Np:(k + 1) * Np, :] for k in range(K - 1)]

        # Hoisted per-(k, i) slabs: K*Ci static slices of [Np, TB].
        slabs = [xg[k][:, i * TB:(i + 1) * TB]
                 for k in range(K) for i in range(Ci)]

        # Per-node projection: K*Ci*Co full-slab FMAs against pre-broadcast
        # per-node weight columns; bias arrives pre-broadcast as well.
        outs = []
        for o in range(Co):
            acc = bb_ref[o]                             # [Np, TB]
            for j in range(K * Ci):
                acc = acc + slabs[j] * wb_ref[j * Co + o]
            outs.append(acc)

        # Lane-dense [Np, Co*TB] store (o-major); Co*TB % 128 == 0 -> unmasked.
        out_ref[0] = jnp.concatenate(outs, axis=-1).astype(out_ref.dtype)

    x_blk = Np * Ci * TB * x_itemsize
    out_blk = Np * Co * TB * x_itemsize
    sup_bytes = (K - 1) * Np * Np * sup_itemsize
    wb_bytes = kcico * Np * TB * 4
    bb_bytes = Co * Np * TB * 4
    inter = ((K - 1) * Np * Ci * TB * 4
             + (K * Ci + 2 * Co) * Np * TB * 4
             + Np * (Ci + Co) * TB * 4)
    batch_need = 2 * (x_blk + out_blk + sup_bytes + wb_bytes + bb_bytes) + inter
    batch_vmem = int(min(max(2 * batch_need, 16 << 20), 40 << 20))

    batch_flops = n_tiles * (2 * (K - 1) * Np * Np * Ci * TB
                             + 2 * Np * kcico * TB)
    batch_bytes = (n_tiles * (x_blk + out_blk)
                   + sup_bytes + wb_bytes + bb_bytes)

    out_tiled = pl.pallas_call(
        batch_kernel,
        out_shape=jax.ShapeDtypeStruct((n_tiles, Np, Co * TB), x.dtype),
        grid_spec=pltpu.PrefetchScalarGridSpec(
            num_scalar_prefetch=0,
            grid=(n_tiles,),
            in_specs=[
                pl.BlockSpec((1, Np, Ci * TB), lambda b: (b, 0, 0)),
                # Grid-invariant inputs: constant index_map -> fetched once
                # and kept resident across all batch tiles.
                pl.BlockSpec(((K - 1) * Np, Np), lambda b: (0, 0)),
                pl.BlockSpec((kcico, Np, TB), lambda b: (0, 0, 0)),
                pl.BlockSpec((Co, Np, TB), lambda b: (0, 0, 0)),
            ],
            out_specs=pl.BlockSpec((1, Np, Co * TB), lambda b: (b, 0, 0)),
        ),
        compiler_params=pltpu.CompilerParams(
            # Setup is hoisted out, so batch tiles are independent -> a
            # 2-TensorCore chip (v7x) can split them across cores.
            dimension_semantics=("parallel",),
            vmem_limit_bytes=batch_vmem,
        ),
        cost_estimate=pl.CostEstimate(flops=int(batch_flops),
                                      transcendentals=0,
                                      bytes_accessed=int(batch_bytes)),
    )(x_tiled, supports, w_bcast, b_bcast)

    # [nT, Np, Co*TB] -> [nT, Np, Co, TB] -> [nT, TB, Np, Co] -> [Bp, Np, Co]
    out = (out_tiled.reshape(n_tiles, Np, Co, TB)
                    .transpose(0, 3, 1, 2)
                    .reshape(Bp, Np, Co))
    return out[:B, :N, :]


def agcn_reference(x, node_embeddings, weights_pool, bias_pool):
    """Pure-JAX reference mirroring the PyTorch forward exactly."""
    N = node_embeddings.shape[0]
    cheb_k = weights_pool.shape[1]
    supports = jax.nn.softmax(
        jnp.maximum(node_embeddings @ node_embeddings.T, 0.0), axis=1)
    support_set = [jnp.eye(N, dtype=x.dtype), supports]
    for _ in range(2, cheb_k):
        support_set.append(2.0 * supports @ support_set[-1] - support_set[-2])
    supports = jnp.stack(support_set, axis=0)
    weights = jnp.einsum('nd,dkio->nkio', node_embeddings, weights_pool)
    bias = node_embeddings @ bias_pool
    x_g = jnp.einsum('knm,bmc->bknc', supports, x)
    x_g = jnp.transpose(x_g, (0, 2, 1, 3))
    return jnp.einsum('bnki,nkio->bno', x_g, weights) + bias


if __name__ == "__main__":
    # Small shapes consistent with the module; B=36 with the default
    # lane-dense TB=32 exercises batch padding AND a multi-step parallel grid.
    B, N, dim_in, dim_out, cheb_k, embed_dim = 36, 16, 4, 8, 3, 8

    key = jax.random.PRNGKey(0)
    kx, ke, kw, kb = jax.random.split(key, 4)
    x = jax.random.normal(kx, (B, N, dim_in), dtype=jnp.float32)
    node_embeddings = jax.random.normal(ke, (N, embed_dim), dtype=jnp.float32)
    # Deterministic parameter init (torch.FloatTensor is uninitialized memory,
    # so any deterministic init is semantically acceptable).
    weights_pool = 0.1 * jax.random.normal(
        kw, (embed_dim, cheb_k, dim_in, dim_out), dtype=jnp.float32)
    bias_pool = 0.1 * jax.random.normal(
        kb, (embed_dim, dim_out), dtype=jnp.float32)

    out = agcn_forward(x, node_embeddings, weights_pool, bias_pool)
    out = jax.block_until_ready(out)

    ref = agcn_reference(x, node_embeddings, weights_pool, bias_pool)
    assert out.shape == (B, N, dim_out)
    err = jnp.max(jnp.abs(out - ref))
    assert jnp.allclose(out, ref, atol=1e-3, rtol=1e-3), f"max abs err = {err}"

    print("KERNEL_OK")
</pallas_src>

<mosaic_0001>
module attributes {stable_mosaic.version = 11 : i64} {
  func.func @setup_kernel(%arg0: memref<16x8xf32, #tpu.memory_space<vmem>>, %arg1: memref<8x96xf32, #tpu.memory_space<vmem>>, %arg2: memref<8x8xf32, #tpu.memory_space<vmem>>, %arg3: memref<32x16xf32, #tpu.memory_space<vmem>>, %arg4: memref<16x96xf32, #tpu.memory_space<vmem>>, %arg5: memref<16x8xf32, #tpu.memory_space<vmem>>) attributes {dimension_semantics = [], scalar_prefetch = 0 : i64, scratch_operands = 0 : i64, tpu.core_type = #tpu.core_type<tc>} {
    %c0 = arith.constant 0 : index
    %c0_0 = arith.constant 0 : index
    %0 = vector.load %arg0[%c0, %c0_0] : memref<16x8xf32, #tpu.memory_space<vmem>>, vector<16x8xf32>
    %cst = arith.constant dense<0.000000e+00> : vector<16x16xf32>
    %1 = tpu.matmul %0, %0, %cst {dimension_numbers = #tpu.dot_dimension_numbers<[1], [1], [0], [0], [0, 0, 1, 0], [], []>} : vector<16x8xf32>, vector<16x8xf32>, vector<16x16xf32> -> vector<16x16xf32>
    %cst_1 = arith.constant 0.000000e+00 : f32
    %2 = vector.broadcast %cst_1 : f32 to vector<16x16xf32>
    %3 = arith.maximumf %1, %2 : vector<16x16xf32>
    %cst_2 = arith.constant dense<0xFF800000> : vector<16xf32>
    %4 = vector.multi_reduction <maximumf>, %3, %cst_2 [1] : vector<16x16xf32> to vector<16xf32>
    %5 = vector.shape_cast %4 : vector<16xf32> to vector<16x1xf32>
    %6 = vector.broadcast %5 : vector<16x1xf32> to vector<16x16xf32>
    %7 = arith.subf %3, %6 : vector<16x16xf32>
    %8 = math.exp %7 : vector<16x16xf32>
    %cst_3 = arith.constant dense<0.000000e+00> : vector<16xf32>
    %9 = vector.multi_reduction <add>, %8, %cst_3 [1] : vector<16x16xf32> to vector<16xf32>
    %10 = vector.shape_cast %9 : vector<16xf32> to vector<16x1xf32>
    %11 = vector.broadcast %10 : vector<16x1xf32> to vector<16x16xf32>
    %12 = arith.divf %8, %11 : vector<16x16xf32>
    %13 = tpu.iota {dimensions = array<i32: 0>} : vector<16x16xi32>
    %14 = tpu.iota {dimensions = array<i32: 1>} : vector<16x16xi32>
    %15 = arith.cmpi eq, %13, %14 : vector<16x16xi32>
    %cst_4 = arith.constant 1.000000e+00 : f32
    %cst_5 = arith.constant 0.000000e+00 : f32
    %16 = vector.broadcast %cst_4 : f32 to vector<16x16xf32>
    %17 = vector.broadcast %cst_5 : f32 to vector<16x16xf32>
    %18 = arith.select %15, %16, %17 : vector<16x16xi1>, vector<16x16xf32>
    %cst_6 = arith.constant dense<0.000000e+00> : vector<16x16xf32>
    %19 = tpu.matmul %12, %12, %cst_6 {dimension_numbers = #tpu.dot_dimension_numbers<[1], [0], [0], [1], [0, 0, 1, 1], [], []>} : vector<16x16xf32>, vector<16x16xf32>, vector<16x16xf32> -> vector<16x16xf32>
    %cst_7 = arith.constant 2.000000e+00 : f32
    %20 = vector.broadcast %cst_7 : f32 to vector<16x16xf32>
    %21 = arith.mulf %20, %19 : vector<16x16xf32>
    %22 = arith.subf %21, %18 : vector<16x16xf32>
    %c0_8 = arith.constant 0 : index
    %c0_9 = arith.constant 0 : index
    %23 = vector.load %arg3[%c0_8, %c0_9] : memref<32x16xf32, #tpu.memory_space<vmem>>, vector<16x16xf32>
    tpu.vector_store %arg3[%c0_8, %c0_9], %12 {strides = array<i32>} : memref<32x16xf32, #tpu.memory_space<vmem>>, vector<16x16xf32>,
    %c16 = arith.constant 16 : index
    %c0_10 = arith.constant 0 : index
    %24 = vector.load %arg3[%c16, %c0_10] : memref<32x16xf32, #tpu.memory_space<vmem>>, vector<16x16xf32>
    tpu.vector_store %arg3[%c16, %c0_10], %22 {strides = array<i32>} : memref<32x16xf32, #tpu.memory_space<vmem>>, vector<16x16xf32>,
    %c0_11 = arith.constant 0 : index
    %c0_12 = arith.constant 0 : index
    %25 = vector.load %arg1[%c0_11, %c0_12] : memref<8x96xf32, #tpu.memory_space<vmem>>, vector<8x96xf32>
    %cst_13 = arith.constant dense<0.000000e+00> : vector<16x96xf32>
    %26 = tpu.matmul %0, %25, %cst_13 {dimension_numbers = #tpu.dot_dimension_numbers<[1], [0], [0], [1], [0, 0, 1, 1], [], []>} : vector<16x8xf32>, vector<8x96xf32>, vector<16x96xf32> -> vector<16x96xf32>
    %c0_14 = arith.constant 0 : index
    %c0_15 = arith.constant 0 : index
    %27 = vector.load %arg4[%c0_14, %c0_15] : memref<16x96xf32, #tpu.memory_space<vmem>>, vector<16x96xf32>
    tpu.vector_store %arg4[%c0_14, %c0_15], %26 {strides = array<i32>} : memref<16x96xf32, #tpu.memory_space<vmem>>, vector<16x96xf32>,
    %c0_16 = arith.constant 0 : index
    %c0_17 = arith.constant 0 : index
    %28 = vector.load %arg2[%c0_16, %c0_17] : memref<8x8xf32, #tpu.memory_space<vmem>>, vector<8x8xf32>
    %cst_18 = arith.constant dense<0.000000e+00> : vector<16x8xf32>
    %29 = tpu.matmul %0, %28, %cst_18 {dimension_numbers = #tpu.dot_dimension_numbers<[1], [0], [0], [1], [0, 0, 1, 1], [], []>} : vector<16x8xf32>, vector<8x8xf32>, vector<16x8xf32> -> vector<16x8xf32>
    %c0_19 = arith.constant 0 : index
    %c0_20 = arith.constant 0 : index
    %30 = vector.load %arg5[%c0_19, %c0_20] : memref<16x8xf32, #tpu.memory_space<vmem>>, vector<16x8xf32>
    tpu.vector_store %arg5[%c0_19, %c0_20], %29 {strides = array<i32>} : memref<16x8xf32, #tpu.memory_space<vmem>>, vector<16x8xf32>,
    return
  }
}

</mosaic_0001>

<llo_original>
// kernel: tpu_custom_call.1
$region0: #{tpu_custom_call.1}
  #allocation0 [shape = 'u32[]', space=smem, size = 0x4, offset = 0x4, fixed_abs, tag = 'smem constant byte address 0x4 - core index']
  #allocation1 [shape = 'u32[72,128]{1,0:T(1,128)}', space=vmem, size = 0x9000, scoped, tag = 'internal scratch']
  %s0 = inlined_call_operand.vmem [shape: f32[16,8], index: 0, kind: input, shape index: {}]
  %s1 = inlined_call_operand.vmem [shape: f32[8,96], index: 1, kind: input, shape index: {}]
  %s2 = inlined_call_operand.vmem [shape: f32[8,8], index: 2, kind: input, shape index: {}]
  %s3 = inlined_call_operand.vmem [shape: f32[32,16], index: 3, kind: output, shape index: {0}]
  %s4 = inlined_call_operand.hbm [shape: f32[16,96], index: 4, kind: output, shape index: {1}]
  %s5 = inlined_call_operand.vmem [shape: f32[16,8], index: 5, kind: output, shape index: {2}]
  %6 = xla_tuple %s3, %s4, %s5
  %s7 = sld [smem:[#allocation0]]
  $region38: #{tpu_custom_call.1} parent=0
    _
  %s9 = ssub.s32 1, %s7
  %s10 = scalar_select 0, %s9, %s7
  $region1: #{tpu_custom_call.1} parent=0
    #allocation2 [shape = 'u8[8192]{0}', space=vmem, size = 0x2000, scoped, tag = 'output window, operand 1, single buffered']
    #allocation3 [shape = 's32[1]{0}', space=sflag, size = 0x4, scoped, tag = 'scoped memory for tpu_custom_call.1']
    %11 = vsyncpa [#allocation3], 0
    // Predicated region
    $region2: #{tpu_custom_call.1} parent=1 // pred_check
      _
    $region3: #{tpu_custom_call.1} parent=1 // pred_check_branch
      %13 = sbr.rel (0) target = $region5
    $region4: #{tpu_custom_call.1} parent=1 // pred_region
      _
    $region5: #{tpu_custom_call.1} parent=1 // pred_fallthru
      _
    // Predicated region
    $region6: #{tpu_custom_call.1} parent=1 // pred_check
      _
    $region7: #{tpu_custom_call.1} parent=1 // pred_check_branch
      %15 = sbr.rel (0) target = $region9
    $region8: #{tpu_custom_call.1} parent=1 // pred_region
      _
    $region9: #{tpu_custom_call.1} parent=1 // pred_fallthru
      _
    // Predicated region
    $region10: #{tpu_custom_call.1} parent=1 // pred_check
      _
    $region11: #{tpu_custom_call.1} parent=1 // pred_check_branch
      %17 = sbr.rel (0) target = $region13
    $region12: #{tpu_custom_call.1} parent=1 // pred_region
      _
    $region13: #{tpu_custom_call.1} parent=1 // pred_fallthru
      _
    %v18 = vld [vmem:[%s0] sm:$0xff]
    %v19 = vld [vmem:[%s0 + $0x8] sm:$0xff]
    %vm20 = vcmask 64512
    %v22 = vsel %vm20, %v18, 0
    %v25 = vsel %vm20, %v19, 0
    %27 = vmatpush.xpose.msra.mxu0 0.0
    %28 = vmatpush.xpose.msra.mxu0 0.0
    %29 = vmatpush.xpose.msra.mxu0 0.0
    %30 = vmatpush.xpose.msra.mxu0 0.0
    %31 = vmatpush.xpose.msra.mxu0 0.0
    %32 = vmatpush.xpose.msra.mxu0 0.0
    %33 = vmatpush.xpose.msra.mxu0 0.0
    %34 = vmatpush.xpose.msra.mxu0 0.0
    %35 = vmatpush.xpose.msra.mxu0 0.0
    %36 = vmatpush.xpose.msra.mxu0 0.0
    %37 = vmatpush.xpose.msra.mxu0 0.0
    %38 = vmatpush.xpose.msra.mxu0 0.0
    %39 = vmatpush.xpose.msra.mxu0 0.0
    %40 = vmatpush.xpose.msra.mxu0 0.0
    %41 = vmatpush.xpose.msra.mxu0 %v25
    %42 = vmatpush.xpose.msra.mxu0 %v22
    %43 = vmatmul.f32.gmra.mxu0 %v22
    %v44 = vpop.f32.mrf.mxu0
    %v45 = vadd.f32 0.0, %v44
    %46 = vmatmul.f32.gmra.mxu0 %v25
    %v47 = vpop.f32.mrf.mxu0
    %v48 = vadd.f32 0.0, %v47
    %49 = vdwg.mxu0
    %v50 = vmax.f32 %v45, 0.0
    %v51 = vmax.f32 %v48, 0.0
    %vm52 = vcmask 130048
    %v53 = vsel %vm52, %v50, -inf
    %54 = vmax.xlane.f32.xlu0 %v53
    %v55 = vpop.xlane.xlu0 %54
    %v56 = vsel %vm52, %v51, -inf
    %57 = vmax.xlane.f32.xlu0 %v56
    %v58 = vpop.xlane.xlu0 %57
    %v59 = vsub.f32 %v50, %v55
    %v60 = vsub.f32 %v51, %v58
    %v61 = vmul.f32 %v59, 1.442695
    %v62 = vpow.pop %v61
    %v63 = vmul.f32 %v60, 1.442695
    %v64 = vpow.pop %v63
    %v65 = vsel %vm52, %v62, 0.0
    %66 = vadd.xlane.f32.xlu0 %v65
    %v67 = vpop.xlane.xlu0 %66
    %v68 = vsel %vm52, %v64, 0.0
    %69 = vadd.xlane.f32.xlu0 %v68
    %v70 = vpop.xlane.xlu0 %69
    %v71 = vrcp.pop %v67
    %v72 = vmul.f32 %v67, %v71
    %v73 = vsub.f32 1.0, %v72
    %v74 = vmul.f32 %v71, %v73
    %v75 = vadd.f32 %v71, %v74
    %vm76 = vweird.f32 %v67
    %vm77 = vweird.f32 %v71
    %vm78 = vmor %vm76, %vm77
    %v79 = vsel %vm78, %v71, %v75
    %v80 = vand.u32 2147483647, %v67
    %vm81 = vcmp.eq.f32.partialorder %v80, 8.507059e+37
    %v82 = vand.u32 %v67, 2147483648
    %v83 = vor.u32 1.1754944e-38, %v82
    %v84 = vsel %vm81, %v83, %v79
    %v85 = vmul.f32 %v62, %v84
    %v86 = vrcp.pop %v70
    %v87 = vmul.f32 %v70, %v86
    %v88 = vsub.f32 1.0, %v87
    %v89 = vmul.f32 %v86, %v88
    %v90 = vadd.f32 %v86, %v89
    %vm91 = vweird.f32 %v70
    %vm92 = vweird.f32 %v86
    %vm93 = vmor %vm91, %vm92
    %v94 = vsel %vm93, %v86, %v90
    %v95 = vand.u32 2147483647, %v70
    %vm96 = vcmp.eq.f32.partialorder %v95, 8.507059e+37
    %v97 = vand.u32 %v70, 2147483648
    %v98 = vor.u32 1.1754944e-38, %v97
    %v99 = vsel %vm96, %v98, %v94
    %v100 = vmul.f32 %v64, %v99
    %v101 = vlaneseq
    %v102 = vshrl.u32 %v101, 7
    %v103 = vadd.s32 %v102, 8
    %v104 = vlaneseq
    %v105 = vand.u32 %v104, 127
    %vm106 = vcmp.eq.s32.totalorder %v102, %v105
    %vm107 = vcmp.eq.s32.totalorder %v103, %v105
    %v108 = vsel %vm106, 1.0, 0.0
    %v109 = vsel %vm107, 1.0, 0.0
    %v111 = vsel %vm52, %v85, 0
    %v114 = vsel %vm52, %v100, 0
    %116 = vmatpush.msra.mxu0 0.0
    %117 = vmatpush.msra.mxu0 0.0
    %118 = vmatpush.msra.mxu0 0.0
    %119 = vmatpush.msra.mxu0 0.0
    %120 = vmatpush.msra.mxu0 0.0
    %121 = vmatpush.msra.mxu0 0.0
    %122 = vmatpush.msra.mxu0 0.0
    %123 = vmatpush.msra.mxu0 0.0
    %124 = vmatpush.msra.mxu0 0.0
    %125 = vmatpush.msra.mxu0 0.0
    %126 = vmatpush.msra.mxu0 0.0
    %127 = vmatpush.msra.mxu0 0.0
    %128 = vmatpush.msra.mxu0 0.0
    %129 = vmatpush.msra.mxu0 0.0
    %130 = vmatpush.msra.mxu0 %v100
    %131 = vmatpush.msra.mxu0 %v85
    %132 = vmatmul.f32.gmra.mxu0 %v111
    %v133 = vpop.f32.mrf.mxu0
    %v134 = vadd.f32 0.0, %v133
    %135 = vmatmul.f32.gmra.mxu0 %v114
    %v136 = vpop.f32.mrf.mxu0
    %v137 = vadd.f32 0.0, %v136
    %138 = vdwg.mxu0
    %v139 = vmul.f32 %v134, 2.0
    %v140 = vmul.f32 %v137, 2.0
    %v141 = vsub.f32 %v139, %v108
    %v142 = vsub.f32 %v140, %v109
    %143 = vst.msk [vmem:[%s3] sm:$0xff] %vm52, %v85
    %144 = vst.msk [vmem:[%s3 + $0x8] sm:$0xff] %vm52, %v100
    %145 = vst.msk [vmem:[%s3 + $0x10] sm:$0xff] %vm52, %v141
    %146 = vst.msk [vmem:[%s3 + $0x18] sm:$0xff] %vm52, %v142
    %v147 = vld [vmem:[%s1] sm:$0xff]
    %148 = vmatpush.msra.mxu0 0.0
    %149 = vmatpush.msra.mxu0 0.0
    %150 = vmatpush.msra.mxu0 0.0
    %151 = vmatpush.msra.mxu0 0.0
    %152 = vmatpush.msra.mxu0 0.0
    %153 = vmatpush.msra.mxu0 0.0
    %154 = vmatpush.msra.mxu0 0.0
    %155 = vmatpush.msra.mxu0 0.0
    %156 = vmatpush.msra.mxu0 0.0
    %157 = vmatpush.msra.mxu0 0.0
    %158 = vmatpush.msra.mxu0 0.0
    %159 = vmatpush.msra.mxu0 0.0
    %160 = vmatpush.msra.mxu0 0.0
    %161 = vmatpush.msra.mxu0 0.0
    %162 = vmatpush.msra.mxu0 0.0
    %163 = vmatpush.msra.mxu0 %v147
    %164 = vmatmul.f32.gmra.mxu0 %v22
    %v165 = vpop.f32.mrf.mxu0
    %v166 = vadd.f32 0.0, %v165
    %167 = vmatmul.f32.gmra.mxu0 %v25
    %v168 = vpop.f32.mrf.mxu0
    %v169 = vadd.f32 0.0, %v168
    %170 = vdwg.mxu0
    %vm171 = vcmask 785408
    %172 = vst.msk [vmem:[#allocation2] sm:$0xff] %vm171, %v166
    %173 = vst.msk [vmem:[#allocation2 + $0x8] sm:$0xff] %vm171, %v169
    %v174 = vld [vmem:[%s2] sm:$0xff]
    %175 = vmatpush.msra.mxu0 0.0
    %176 = vmatpush.msra.mxu0 0.0
    %177 = vmatpush.msra.mxu0 0.0
    %178 = vmatpush.msra.mxu0 0.0
    %179 = vmatpush.msra.mxu0 0.0
    %180 = vmatpush.msra.mxu0 0.0
    %181 = vmatpush.msra.mxu0 0.0
    %182 = vmatpush.msra.mxu0 0.0
    %183 = vmatpush.msra.mxu0 0.0
    %184 = vmatpush.msra.mxu0 0.0
    %185 = vmatpush.msra.mxu0 0.0
    %186 = vmatpush.msra.mxu0 0.0
    %187 = vmatpush.msra.mxu0 0.0
    %188 = vmatpush.msra.mxu0 0.0
    %189 = vmatpush.msra.mxu0 0.0
    %190 = vmatpush.msra.mxu0 %v174
    %191 = vmatmul.f32.gmra.mxu0 %v22
    %v192 = vpop.f32.mrf.mxu0
    %v193 = vadd.f32 0.0, %v192
    %194 = vmatmul.f32.gmra.mxu0 %v25
    %v195 = vpop.f32.mrf.mxu0
    %v196 = vadd.f32 0.0, %v195
    %197 = vdwg.mxu0
    %198 = vst.msk [vmem:[%s5] sm:$0xff] %vm20, %v193
    %199 = vst.msk [vmem:[%s5 + $0x8] sm:$0xff] %vm20, %v196
    // Predicated region
    $region14: #{tpu_custom_call.1} parent=1 // pred_check
      _
    $region15: #{tpu_custom_call.1} parent=1 // pred_check_branch
      %201 = sbr.rel (0) target = $region17
    $region16: #{tpu_custom_call.1} parent=1 // pred_region
      _
    $region17: #{tpu_custom_call.1} parent=1 // pred_fallthru
      _
    // Predicated region
    $region18: #{tpu_custom_call.1} parent=1 // pred_check
      _
    $region19: #{tpu_custom_call.1} parent=1 // pred_check_branch
      %203 = sbr.rel (0) target = $region21
    $region20: #{tpu_custom_call.1} parent=1 // pred_region
      %205 = vsyncadd [#allocation3], 0
      %s206 = sshll.u32 [#allocation2], 4
      %s207 = int_to_ptr.vmem [resolvable:$true] %s206
      %s208 = sshll.u32 %s4, 4
      %s209 = int_to_ptr.hbm [resolvable:$true] %s208
      %214 = dma.vmem_to_hbm [thread:$0]  %s207, 256, %s209, [#allocation3], 128, 128, 8
    $region21: #{tpu_custom_call.1} parent=1 // pred_fallthru
      _
    // Predicated region
    $region22: #{tpu_custom_call.1} parent=1 // pred_check
      _
    $region23: #{tpu_custom_call.1} parent=1 // pred_check_branch
      %216 = sbr.rel (0) target = $region25
    $region24: #{tpu_custom_call.1} parent=1 // pred_region
      _
    $region25: #{tpu_custom_call.1} parent=1 // pred_fallthru
      _
    // Predicated region
    $region26: #{tpu_custom_call.1} parent=1 // pred_check
      _
    $region27: #{tpu_custom_call.1} parent=1 // pred_check_branch
      %218 = sbr.rel (0) target = $region29
    $region28: #{tpu_custom_call.1} parent=1 // pred_region
      _
    $region29: #{tpu_custom_call.1} parent=1 // pred_fallthru
      _
    // Predicated region
    $region30: #{tpu_custom_call.1} parent=1 // pred_check
      _
    $region31: #{tpu_custom_call.1} parent=1 // pred_check_branch
      %220 = sbr.rel (0) target = $region33
    $region32: #{tpu_custom_call.1} parent=1 // pred_region
      %222 = dma.done [#allocation3], 256
    $region33: #{tpu_custom_call.1} parent=1 // pred_fallthru
      _
    // Predicated region
    $region34: #{tpu_custom_call.1} parent=1 // pred_check
      _
    $region35: #{tpu_custom_call.1} parent=1 // pred_check_branch
      %224 = sbr.rel (0) target = $region37
    $region36: #{tpu_custom_call.1} parent=1 // pred_region
      _
    $region37: #{tpu_custom_call.1} parent=1 // pred_fallthru
      _
    %225 = vsyncpa [#allocation3], 1

</llo_original>
